<compile_context>
chip_gen: v6e
topology: v6e:2x2x1
jax: 0.10.0
libtpu: 0.0.40
codegen_flags: <defaults>
</compile_context>

<pallas_src>
import jax
import jax.numpy as jnp
from jax.experimental import pallas as pl
from jax.experimental.pallas import tpu as pltpu


def _round_up(x, m):
    return (x + m - 1) // m * m


def _mf_bpr_kernel(u_ref, pos_ref, neg_ref, out_ref):
    # Blocks: u/pos [TB, D], neg [TB, N, D], out [TB, N].
    # Upcast to f32 inside the kernel (inputs arrive in the table's dtype).
    u = u_ref[...].astype(jnp.float32)                     # [TB, D]
    pos = pos_ref[...].astype(jnp.float32)                 # [TB, D]
    neg = neg_ref[...].astype(jnp.float32)                 # [TB, N, D]
    d = neg.shape[-1]

    logit_ui = jnp.sum(u * pos, axis=-1, keepdims=True)    # [TB, 1]

    if d >= 128:
        # Production-sized embeddings: contract D on the MXU.
        logit_uj = jnp.einsum("bnd,bd->bn", neg, u,
                              preferred_element_type=jnp.float32)   # [TB, N]
    else:
        # Small D (demo: D=32): VPU multiply + lane reduce.
        logit_uj = jnp.sum(neg * u[:, None, :], axis=-1)             # [TB, N]

    out_ref[...] = (logit_ui - logit_uj).astype(out_ref.dtype)       # [TB, N]


def mf_forward(user_emb_table, item_emb_table, user, pos_item, neg_item,
               *, block_b=128, vmem_budget_bytes=8 * 1024 * 1024):
    """BPR forward: returns logit_uij of shape [B, N] (float32)."""
    # Embedding gathers stay in XLA: they are data-dependent row lookups that a
    # BlockSpec index_map cannot express for a [B, N] index tensor.
    # TODO(synk): for very large B*N, a scalar-prefetched manual DMA gather of
    # item rows straight from HBM (memory_space=pl.ANY + make_async_copy) would
    # avoid materializing neg_j in HBM and roughly halve the dominant traffic.
    u = jnp.take(user_emb_table, user, axis=0)             # [B, D]
    pos_i = jnp.take(item_emb_table, pos_item, axis=0)     # [B, D]
    neg_j = jnp.take(item_emb_table, neg_item, axis=0)     # [B, N, D]

    B, D = u.shape
    N = neg_j.shape[1]
    esz = jnp.dtype(neg_j.dtype).itemsize

    # --- pick a batch tile: as large as possible while the double-buffered
    #     per-step working set stays small on every TPU generation.
    lanes = _round_up(D, 128)          # minor dim is padded to 128 lanes in VMEM

    def footprint(t):
        neg_bytes = t * N * lanes * esz
        small = 2 * t * lanes * esz + t * _round_up(N, 128) * 4
        return 2 * (neg_bytes + small)                     # x2: double buffering

    tb = max(8, _round_up(min(block_b, _round_up(B, 8)), 8))
    while tb > 8 and footprint(tb) > vmem_budget_bytes:
        tb = _round_up(tb // 2, 8)

    # --- pad batch to a multiple of the tile so the grid divides evenly.
    B_pad = _round_up(B, tb)
    if B_pad != B:
        pad = B_pad - B
        u = jnp.pad(u, ((0, pad), (0, 0)))
        pos_i = jnp.pad(pos_i, ((0, pad), (0, 0)))
        neg_j = jnp.pad(neg_j, ((0, pad), (0, 0), (0, 0)))

    grid = (B_pad // tb,)

    cost = pl.CostEstimate(
        flops=2 * B_pad * N * D + 2 * B_pad * D,
        transcendentals=0,
        bytes_accessed=esz * (B_pad * N * D + 2 * B_pad * D) + 4 * B_pad * N,
    )

    out = pl.pallas_call(
        _mf_bpr_kernel,
        out_shape=jax.ShapeDtypeStruct((B_pad, N), jnp.float32),
        grid=grid,
        in_specs=[
            pl.BlockSpec((tb, D), lambda i: (i, 0)),        # u tile
            pl.BlockSpec((tb, D), lambda i: (i, 0)),        # pos tile
            pl.BlockSpec((tb, N, D), lambda i: (i, 0, 0)),  # neg tile
        ],
        out_specs=pl.BlockSpec((tb, N), lambda i: (i, 0)),
        compiler_params=pltpu.CompilerParams(
            dimension_semantics=("parallel",)),
        cost_estimate=cost,
    )(u, pos_i, neg_j)

    return out[:B]


if __name__ == "__main__":
    # Small, deterministic setup consistent with the module's __init__.
    n_users = 32          # vocab_obj.user_num
    n_items = 64          # vocab_obj.item_num
    emb_size = 32         # args.user_emb_size == args.item_emb_size
    B = 64                # batch of (user, pos_item) pairs
    N = 8                 # negatives per user

    key = jax.random.PRNGKey(0)
    k_u, k_i, k_idx_u, k_idx_p, k_idx_n = jax.random.split(key, 5)

    initrange = 0.1
    user_emb_table = jax.random.uniform(
        k_u, (n_users, emb_size), jnp.float32, -initrange, initrange)
    item_emb_table = jax.random.uniform(
        k_i, (n_items, emb_size), jnp.float32, -initrange, initrange)

    user = jax.random.randint(k_idx_u, (B,), 0, n_users, jnp.int32)
    pos_item = jax.random.randint(k_idx_p, (B,), 0, n_items, jnp.int32)
    neg_item = jax.random.randint(k_idx_n, (B, N), 0, n_items, jnp.int32)

    # block_b=16 -> grid=(4,) at this small B, exercising the pipelined path.
    out = mf_forward(user_emb_table, item_emb_table, user, pos_item, neg_item,
                     block_b=16)
    out = jax.block_until_ready(out)

    # Pure-JAX reference check.
    u_ref = user_emb_table[user]
    pos_ref = item_emb_table[pos_item]
    neg_ref = item_emb_table[neg_item]
    logit_ui = jnp.sum(u_ref * pos_ref, axis=-1)
    logit_uj = jnp.sum(u_ref[:, None, :] * neg_ref, axis=-1)
    expected = logit_ui[:, None] - logit_uj
    assert out.shape == (B, N)
    assert jnp.allclose(out, expected, atol=1e-5, rtol=1e-5)

    print("KERNEL_OK")
</pallas_src>

<mosaic_0001>
module attributes {stable_mosaic.version = 11 : i64} {
  func.func @_mf_bpr_kernel(%arg0: i32, %arg1: memref<16x32xf32, #tpu.memory_space<vmem>>, %arg2: memref<16x32xf32, #tpu.memory_space<vmem>>, %arg3: memref<16x8x32xf32, #tpu.memory_space<vmem>>, %arg4: memref<16x8xf32, #tpu.memory_space<vmem>>) attributes {dimension_semantics = [#tpu.dimension_semantics<parallel>], iteration_bounds = array<i64: 4>, scalar_prefetch = 0 : i64, scratch_operands = 0 : i64, tpu.core_type = #tpu.core_type<tc>, window_params = [{transform_indices = @transform_0, window_bounds = array<i64: 16, 32>}, {transform_indices = @transform_1, window_bounds = array<i64: 16, 32>}, {transform_indices = @transform_2, window_bounds = array<i64: 16, 8, 32>}, {transform_indices = @transform_3, window_bounds = array<i64: 16, 8>}]} {
    %c0 = arith.constant 0 : index
    %c0_0 = arith.constant 0 : index
    %0 = vector.load %arg1[%c0, %c0_0] : memref<16x32xf32, #tpu.memory_space<vmem>>, vector<16x32xf32>
    %c0_1 = arith.constant 0 : index
    %c0_2 = arith.constant 0 : index
    %1 = vector.load %arg2[%c0_1, %c0_2] : memref<16x32xf32, #tpu.memory_space<vmem>>, vector<16x32xf32>
    %c0_3 = arith.constant 0 : index
    %c0_4 = arith.constant 0 : index
    %c0_5 = arith.constant 0 : index
    %2 = vector.load %arg3[%c0_3, %c0_4, %c0_5] : memref<16x8x32xf32, #tpu.memory_space<vmem>>, vector<16x8x32xf32>
    %3 = arith.mulf %0, %1 : vector<16x32xf32>
    %cst = arith.constant dense<0.000000e+00> : vector<16xf32>
    %4 = vector.multi_reduction <add>, %3, %cst [1] : vector<16x32xf32> to vector<16xf32>
    %5 = vector.shape_cast %4 : vector<16xf32> to vector<16x1xf32>
    %6 = vector.shape_cast %0 : vector<16x32xf32> to vector<16x1x32xf32>
    %7 = vector.broadcast %6 : vector<16x1x32xf32> to vector<16x8x32xf32>
    %8 = arith.mulf %2, %7 : vector<16x8x32xf32>
    %cst_6 = arith.constant dense<0.000000e+00> : vector<16x8xf32>
    %9 = vector.multi_reduction <add>, %8, %cst_6 [2] : vector<16x8x32xf32> to vector<16x8xf32>
    %10 = vector.broadcast %5 : vector<16x1xf32> to vector<16x8xf32>
    %11 = arith.subf %10, %9 : vector<16x8xf32>
    %c0_7 = arith.constant 0 : index
    %c0_8 = arith.constant 0 : index
    %12 = vector.load %arg4[%c0_7, %c0_8] : memref<16x8xf32, #tpu.memory_space<vmem>>, vector<16x8xf32>
    tpu.vector_store %arg4[%c0_7, %c0_8], %11 {strides = array<i32>} : memref<16x8xf32, #tpu.memory_space<vmem>>, vector<16x8xf32>,
    return
  }
  func.func @transform_0(%arg0: i32) -> (i32, i32) {
    %c0_i32 = arith.constant 0 : i32
    %c0_i32_0 = arith.constant 0 : i32
    return %arg0, %c0_i32 : i32, i32
  }
  func.func @transform_1(%arg0: i32) -> (i32, i32) {
    %c0_i32 = arith.constant 0 : i32
    %c0_i32_0 = arith.constant 0 : i32
    return %arg0, %c0_i32 : i32, i32
  }
  func.func @transform_2(%arg0: i32) -> (i32, i32, i32) {
    %c0_i32 = arith.constant 0 : i32
    %c0_i32_0 = arith.constant 0 : i32
    %c0_i32_1 = arith.constant 0 : i32
    return %arg0, %c0_i32, %c0_i32_0 : i32, i32, i32
  }
  func.func @transform_3(%arg0: i32) -> (i32, i32) {
    %c0_i32 = arith.constant 0 : i32
    %c0_i32_0 = arith.constant 0 : i32
    return %arg0, %c0_i32 : i32, i32
  }
}

</mosaic_0001>

<llo_original>
// kernel: tpu_custom_call.1
$region0: #{tpu_custom_call.1}
  #allocation0 [shape = 'u32[]', space=smem, size = 0x4, offset = 0x4, fixed_abs, tag = 'smem constant byte address 0x4 - core index']
  #allocation1 [shape = 'u32[144,128]{1,0:T(1,128)}', space=vmem, size = 0x12000, scoped, tag = 'internal scratch']
  %s0 = inlined_call_operand.vmem [shape: f32[64,32], index: 0, kind: input, shape index: {}]
  %s1 = inlined_call_operand.vmem [shape: f32[64,32], index: 1, kind: input, shape index: {}]
  %s2 = inlined_call_operand.vmem [shape: f32[64,8,32], index: 2, kind: input, shape index: {}]
  %s3 = inlined_call_operand.vmem [shape: f32[64,8], index: 3, kind: output, shape index: {}]
  %s4 = sld [smem:[#allocation0]]
  $region45: #{tpu_custom_call.1} parent=0
    _
  %s6 = ssub.s32 1, %s4
  %s7 = scalar_select 0, %s6, %s4
  loop: start=0, step=1, limit=6
  $region2: #{tpu_custom_call.1} parent=0 // loop_pre_header
    _
  $region3: #{tpu_custom_call.1} parent=0 // loop_header
    %s9 = sphi 0, %s13
    %p10 = scmp.ge.s32.totalorder %s9, 6
    %s19 = sphi 0, %s21
    %s22 = sphi 0, %s19
    %s23 = sphi 0, %s22
    %s39 = sphi 0, %s23
    %s45 = sphi 0, %s47
    %s48 = sphi 0, %s45
    %s49 = sphi 0, %s48
    %s65 = sphi 0, %s49
    %s71 = sphi 0, %s73
    %s74 = sphi 0, %s71
    %s75 = sphi 0, %s74
    %s91 = sphi 0, %s75
    %s97 = sphi 0, %s99
    %s100 = sphi 0, %s97
    %s101 = sphi 0, %s100
    %s117 = sphi 0, %s101
  $region4: #{tpu_custom_call.1} parent=0 // loop_header_branch
    %12 = sbr.rel (%p10) target = $region8
  $region5: #{tpu_custom_call.1} parent=0 // loop_body
    %s14 = ssub.s32 %s9, 1
    %s15 = ssub.s32 %s9, 2
    %s16 = sadd.s32 %s9, 1
    %s17 = ssub.s32 %s9, %s16
    %p18 = scmp.eq.s32.totalorder %s17, 0
    %s20 = sadd.s32 %s19, 1
    %s21 = scalar_select %p18, %s19, %s20
    %p24 = pneg %p18
    %p25 = scmp.eq.s32.totalorder %s9, 3
    %p26 = por %p24, %p25
    %p27 = scmp.ne.s32.totalorder %s19, %s22
    %p28 = scmp.eq.s32.totalorder %s9, 0
    %p29 = por %p27, %p28
    %p30 = scmp.ne.s32.totalorder %s19, %s22
    %p31 = scmp.eq.s32.totalorder %s14, 3
    %p32 = por %p30, %p31
    %p33 = scmp.ne.s32.totalorder %s22, %s23
    %p34 = scmp.eq.s32.totalorder %s14, 0
    %p35 = por %p33, %p34
    %p36 = scmp.ne.s32.totalorder %s22, %s23
    %p37 = scmp.eq.s32.totalorder %s15, 3
    %p38 = por %p36, %p37
    %p40 = scmp.ne.s32.totalorder %s23, %s39
    %p41 = scmp.eq.s32.totalorder %s15, 0
    %p42 = por %p40, %p41
    %s43 = ssub.s32 %s9, %s16
    %p44 = scmp.eq.s32.totalorder %s43, 0
    %s46 = sadd.s32 %s45, 1
    %s47 = scalar_select %p44, %s45, %s46
    %p50 = pneg %p44
    %p51 = scmp.eq.s32.totalorder %s9, 3
    %p52 = por %p50, %p51
    %p53 = scmp.ne.s32.totalorder %s45, %s48
    %p54 = scmp.eq.s32.totalorder %s9, 0
    %p55 = por %p53, %p54
    %p56 = scmp.ne.s32.totalorder %s45, %s48
    %p57 = scmp.eq.s32.totalorder %s14, 3
    %p58 = por %p56, %p57
    %p59 = scmp.ne.s32.totalorder %s48, %s49
    %p60 = scmp.eq.s32.totalorder %s14, 0
    %p61 = por %p59, %p60
    %p62 = scmp.ne.s32.totalorder %s48, %s49
    %p63 = scmp.eq.s32.totalorder %s15, 3
    %p64 = por %p62, %p63
    %p66 = scmp.ne.s32.totalorder %s49, %s65
    %p67 = scmp.eq.s32.totalorder %s15, 0
    %p68 = por %p66, %p67
    %s69 = ssub.s32 %s9, %s16
    %p70 = scmp.eq.s32.totalorder %s69, 0
    %s72 = sadd.s32 %s71, 1
    %s73 = scalar_select %p70, %s71, %s72
    %p76 = pneg %p70
    %p77 = scmp.eq.s32.totalorder %s9, 3
    %p78 = por %p76, %p77
    %p79 = scmp.ne.s32.totalorder %s71, %s74
    %p80 = scmp.eq.s32.totalorder %s9, 0
    %p81 = por %p79, %p80
    %p82 = scmp.ne.s32.totalorder %s71, %s74
    %p83 = scmp.eq.s32.totalorder %s14, 3
    %p84 = por %p82, %p83
    %p85 = scmp.ne.s32.totalorder %s74, %s75
    %p86 = scmp.eq.s32.totalorder %s14, 0
    %p87 = por %p85, %p86
    %p88 = scmp.ne.s32.totalorder %s74, %s75
    %p89 = scmp.eq.s32.totalorder %s15, 3
    %p90 = por %p88, %p89
    %p92 = scmp.ne.s32.totalorder %s75, %s91
    %p93 = scmp.eq.s32.totalorder %s15, 0
    %p94 = por %p92, %p93
    %s95 = ssub.s32 %s9, %s16
    %p96 = scmp.eq.s32.totalorder %s95, 0
    %s98 = sadd.s32 %s97, 1
    %s99 = scalar_select %p96, %s97, %s98
    %p102 = pneg %p96
    %p103 = scmp.eq.s32.totalorder %s9, 3
    %p104 = por %p102, %p103
    %p105 = scmp.ne.s32.totalorder %s97, %s100
    %p106 = scmp.eq.s32.totalorder %s9, 0
    %p107 = por %p105, %p106
    %p108 = scmp.ne.s32.totalorder %s97, %s100
    %p109 = scmp.eq.s32.totalorder %s14, 3
    %p110 = por %p108, %p109
    %p111 = scmp.ne.s32.totalorder %s100, %s101
    %p112 = scmp.eq.s32.totalorder %s14, 0
    %p113 = por %p111, %p112
    %p114 = scmp.ne.s32.totalorder %s100, %s101
    %p115 = scmp.eq.s32.totalorder %s15, 3
    %p116 = por %p114, %p115
    %p118 = scmp.ne.s32.totalorder %s101, %s117
    %p119 = scmp.eq.s32.totalorder %s15, 0
    %p120 = por %p118, %p119
    %p121 = scmp.le.s32.totalorder 1, %s9
    %p122 = scmp.lt.s32.totalorder %s9, 5
    %p123 = pnand %p121, %p122
    %p124 = pneg %p123
    // Predicated region
    $region9: #{tpu_custom_call.1} parent=5 // pred_check
      _
    $region10: #{tpu_custom_call.1} parent=5 // pred_check_branch
      %126 = sbr.rel (%p123) target = $region12
    $region11: #{tpu_custom_call.1} parent=5 // pred_region
      %s127 = ssub.s32 %s9, 1
    $region12: #{tpu_custom_call.1} parent=5 // pred_fallthru
      _
    %p128 = scmp.lt.s32.totalorder %s9, 4
    // Predicated region
    $region13: #{tpu_custom_call.1} parent=5 // pred_check
      %p129 = pneg %p128
    $region14: #{tpu_custom_call.1} parent=5 // pred_check_branch
      %131 = sbr.rel (%p129) target = $region16
    $region15: #{tpu_custom_call.1} parent=5 // pred_region
      // Predicated region
      $region17: #{tpu_custom_call.1} parent=15 // pred_check
        %p132 = pneg %p29
      $region18: #{tpu_custom_call.1} parent=15 // pred_check_branch
        %134 = sbr.rel (%p132) target = $region20
      $region19: #{tpu_custom_call.1} parent=15 // pred_region
        %s135 = smul.u32 2, %s9
        %p136 = scmp.lt.s32.totalorder %s135, 7
        %s137 = scalar_select %p136, %s135, 7
        %s138 = smul.addr %s137, 8
        %s139 = scalar_lea.vmem %s0, %s138
        %s140 = smul.u32 2, %s9
      $region20: #{tpu_custom_call.1} parent=15 // pred_fallthru
        _
      // Predicated region
      $region21: #{tpu_custom_call.1} parent=15 // pred_check
        %p141 = pneg %p55
      $region22: #{tpu_custom_call.1} parent=15 // pred_check_branch
        %143 = sbr.rel (%p141) target = $region24
      $region23: #{tpu_custom_call.1} parent=15 // pred_region
        %s144 = smul.u32 2, %s9
        %p145 = scmp.lt.s32.totalorder %s144, 7
        %s146 = scalar_select %p145, %s144, 7
        %s147 = smul.addr %s146, 8
        %s148 = scalar_lea.vmem %s1, %s147
        %s149 = smul.u32 2, %s9
      $region24: #{tpu_custom_call.1} parent=15 // pred_fallthru
        _
      // Predicated region
      $region25: #{tpu_custom_call.1} parent=15 // pred_check
        %p150 = pneg %p81
      $region26: #{tpu_custom_call.1} parent=15 // pred_check_branch
        %152 = sbr.rel (%p150) target = $region28
      $region27: #{tpu_custom_call.1} parent=15 // pred_region
        %s153 = smul.u32 16, %s9
        %p154 = scmp.lt.s32.totalorder %s153, 63
        %s155 = scalar_select %p154, %s153, 63
        %s156 = smul.addr %s155, 8
        %s157 = scalar_lea.vmem %s2, %s156
        %s158 = smul.u32 16, %s9
      $region28: #{tpu_custom_call.1} parent=15 // pred_fallthru
        _
    $region16: #{tpu_custom_call.1} parent=5 // pred_fallthru
      _
    %p159 = scmp.le.s32.totalorder 1, %s9
    %p160 = scmp.lt.s32.totalorder %s9, 5
    %p161 = pnand %p159, %p160
    %p162 = pneg %p161
    // Predicated region
    $region29: #{tpu_custom_call.1} parent=5 // pred_check
      _
    $region30: #{tpu_custom_call.1} parent=5 // pred_check_branch
      %164 = sbr.rel (%p161) target = $region32
    $region31: #{tpu_custom_call.1} parent=5 // pred_region
      %s165 = ssub.s32 %s9, 1
      %s166 = smul.u32 2, %s14
      %p167 = scmp.lt.s32.totalorder %s166, 7
      %s168 = scalar_select %p167, %s166, 7
      %s169 = smul.addr %s168, 8
      %s170 = scalar_lea.vmem %s0, %s169
      %p171 = pneg %p35
      %p172 = pneg %p32
      %s173 = smul.u32 2, %s14
      %p174 = scmp.lt.s32.totalorder %s173, 7
      %s175 = scalar_select %p174, %s173, 7
      %s176 = smul.addr %s175, 8
      %s177 = scalar_lea.vmem %s1, %s176
      %p178 = pneg %p61
      %p179 = pneg %p58
      %s180 = smul.u32 16, %s14
      %p181 = scmp.lt.s32.totalorder %s180, 63
      %s182 = scalar_select %p181, %s180, 63
      %s183 = smul.addr %s182, 8
      %s184 = scalar_lea.vmem %s2, %s183
      %p185 = pneg %p87
      %p186 = pneg %p84
      %p187 = pneg %p113
      %p188 = pneg %p110
      %s189 = smul.u32 2, %s14
      %p190 = scmp.lt.s32.totalorder %s189, 7
      %s191 = scalar_select %p190, %s189, 7
      %s192 = smul.addr %s191, 8
      %s193 = scalar_lea.vmem %s3, %s192
      %s194 = smul.u32 2, %s14
      %p195 = scmp.lt.s32.totalorder %s194, 7
      %s196 = scalar_select %p195, %s194, 7
      %s197 = smul.addr %s196, 8
      %s198 = scalar_lea.vmem %s0, %s197
      %s199 = smul.u32 2, %s14
      %s200 = smul.u32 2, %s14
      %p201 = scmp.lt.s32.totalorder %s200, 7
      %s202 = scalar_select %p201, %s200, 7
      %s203 = smul.addr %s202, 8
      %s204 = scalar_lea.vmem %s1, %s203
      %s205 = smul.u32 2, %s14
      %s206 = smul.u32 16, %s14
      %p207 = scmp.lt.s32.totalorder %s206, 63
      %s208 = scalar_select %p207, %s206, 63
      %s209 = smul.addr %s208, 8
      %s210 = scalar_lea.vmem %s2, %s209
      %s211 = smul.u32 16, %s14
      %s212 = smul.u32 2, %s14
      %p213 = scmp.lt.s32.totalorder %s212, 7
      %s214 = scalar_select %p213, %s212, 7
      %s215 = smul.addr %s214, 8
      %s216 = scalar_lea.vmem %s3, %s215
      %s217 = smul.u32 2, %s14
      %v218 = vld [vmem:[%s198] sm:$0xff]
      %v219 = vld [vmem:[%s198 + $0x8] sm:$0xff]
      %v220 = vld [vmem:[%s204] sm:$0xff]
      %v221 = vld [vmem:[%s204 + $0x8] sm:$0xff]
      %v222 = vld [vmem:[%s210] sm:$0xff]
      %v223 = vld [vmem:[%s210 + $0x8] sm:$0xff]
      %v224 = vld [vmem:[%s210 + $0x10] sm:$0xff]
      %v225 = vld [vmem:[%s210 + $0x18] sm:$0xff]
      %v226 = vld [vmem:[%s210 + $0x20] sm:$0xff]
      %v227 = vld [vmem:[%s210 + $0x28] sm:$0xff]
      %v228 = vld [vmem:[%s210 + $0x30] sm:$0xff]
      %v229 = vld [vmem:[%s210 + $0x38] sm:$0xff]
      %v230 = vld [vmem:[%s210 + $0x40] sm:$0xff]
      %v231 = vld [vmem:[%s210 + $0x48] sm:$0xff]
      %v232 = vld [vmem:[%s210 + $0x50] sm:$0xff]
      %v233 = vld [vmem:[%s210 + $0x58] sm:$0xff]
      %v234 = vld [vmem:[%s210 + $0x60] sm:$0xff]
      %v235 = vld [vmem:[%s210 + $0x68] sm:$0xff]
      %v236 = vld [vmem:[%s210 + $0x70] sm:$0xff]
      %v237 = vld [vmem:[%s210 + $0x78] sm:$0xff]
      %v238 = vmul.f32 %v218, %v220
      %v239 = vmul.f32 %v219, %v221
      %vm240 = vcmask 261120
      %v241 = vsel %vm240, %v238, 0.0
      %242 = vadd.xlane.f32.xlu0 %v241
      %v243 = vpop.xlane.xlu0 %242
      %v244 = vsel %vm240, %v239, 0.0
      %245 = vadd.xlane.f32.xlu0 %v244
      %v246 = vpop.xlane.xlu0 %245
      %v249 = vcombine.high %v218, %v218
      %v251 = vunpack.c.l.s4 1966171168
      %v252 = vunpack.c.0.s8 %v251
      %v253 = vlaneseq
      %v254 = vshrl.u32 %v253, 7
      %v255 = vsub.s32 %v252, %v254
      %v256 = vrot.slane %v218, %v255
      %v258 = vunpack.c.l.s4 1966171168
      %v259 = vunpack.c.0.s8 %v258
      %v260 = vlaneseq
      %v261 = vshrl.u32 %v260, 7
      %v262 = vsub.s32 %v259, %v261
      %v263 = vrot.slane %v249, %v262
      %v264 = vcombine.high %v256, %v256
      %v265 = vcombine.high %v263, %v263
      %v267 = vunpack.c.l.s4 1966171168
      %v268 = vunpack.c.0.s8 %v267
      %v269 = vlaneseq
      %v270 = vshrl.u32 %v269, 7
      %v271 = vsub.s32 %v268, %v270
      %v272 = vrot.slane %v256, %v271
      %v274 = vunpack.c.l.s4 1966171168
      %v275 = vunpack.c.0.s8 %v274
      %v276 = vlaneseq
      %v277 = vshrl.u32 %v276, 7
      %v278 = vsub.s32 %v275, %v277
      %v279 = vrot.slane %v263, %v278
      %v281 = vunpack.c.l.s4 1966171168
      %v282 = vunpack.c.0.s8 %v281
      %v283 = vlaneseq
      %v284 = vshrl.u32 %v283, 7
      %v285 = vsub.s32 %v282, %v284
      %v286 = vrot.slane %v264, %v285
      %v288 = vunpack.c.l.s4 1966171168
      %v289 = vunpack.c.0.s8 %v288
      %v290 = vlaneseq
      %v291 = vshrl.u32 %v290, 7
      %v292 = vsub.s32 %v289, %v291
      %v293 = vrot.slane %v265, %v292
      %v294 = vcombine.high %v272, %v272
      %v295 = vcombine.high %v279, %v279
      %v296 = vcombine.high %v286, %v286
      %v297 = vcombine.high %v293, %v293
      %v298 = vcombine.high %v219, %v219
      %v300 = vunpack.c.l.s4 1966171168
      %v301 = vunpack.c.0.s8 %v300
      %v302 = vlaneseq
      %v303 = vshrl.u32 %v302, 7
      %v304 = vsub.s32 %v301, %v303
      %v305 = vrot.slane %v219, %v304
      %v307 = vunpack.c.l.s4 1966171168
      %v308 = vunpack.c.0.s8 %v307
      %v309 = vlaneseq
      %v310 = vshrl.u32 %v309, 7
      %v311 = vsub.s32 %v308, %v310
      %v312 = vrot.slane %v298, %v311
      %v313 = vcombine.high %v305, %v305
      %v314 = vcombine.high %v312, %v312
      %v316 = vunpack.c.l.s4 1966171168
      %v317 = vunpack.c.0.s8 %v316
      %v318 = vlaneseq
      %v319 = vshrl.u32 %v318, 7
      %v320 = vsub.s32 %v317, %v319
      %v321 = vrot.slane %v305, %v320
      %v323 = vunpack.c.l.s4 1966171168
      %v324 = vunpack.c.0.s8 %v323
      %v325 = vlaneseq
      %v326 = vshrl.u32 %v325, 7
      %v327 = vsub.s32 %v324, %v326
      %v328 = vrot.slane %v312, %v327
      %v330 = vunpack.c.l.s4 1966171168
      %v331 = vunpack.c.0.s8 %v330
      %v332 = vlaneseq
      %v333 = vshrl.u32 %v332, 7
      %v334 = vsub.s32 %v331, %v333
      %v335 = vrot.slane %v313, %v334
      %v337 = vunpack.c.l.s4 1966171168
      %v338 = vunpack.c.0.s8 %v337
      %v339 = vlaneseq
      %v340 = vshrl.u32 %v339, 7
      %v341 = vsub.s32 %v338, %v340
      %v342 = vrot.slane %v314, %v341
      %v343 = vcombine.high %v321, %v321
      %v344 = vcombine.high %v328, %v328
      %v345 = vcombine.high %v335, %v335
      %v346 = vcombine.high %v342, %v342
      %v347 = vlaneseq
      %v348 = vshrl.u32 %v347, 7
      %v349 = vsub.s32 0, %v348
      %v350 = vrot.slane %v272, %v349
      %v351 = vlaneseq
      %v352 = vshrl.u32 %v351, 7
      %v353 = vsub.s32 0, %v352
      %v354 = vrot.slane %v286, %v353
      %v355 = vlaneseq
      %v356 = vshrl.u32 %v355, 7
      %v357 = vsub.s32 0, %v356
      %v358 = vrot.slane %v294, %v357
      %v359 = vlaneseq
      %v360 = vshrl.u32 %v359, 7
      %v361 = vsub.s32 0, %v360
      %v362 = vrot.slane %v296, %v361
      %v363 = vlaneseq
      %v364 = vshrl.u32 %v363, 7
      %v365 = vsub.s32 0, %v364
      %v366 = vrot.slane %v279, %v365
      %v367 = vlaneseq
      %v368 = vshrl.u32 %v367, 7
      %v369 = vsub.s32 0, %v368
      %v370 = vrot.slane %v293, %v369
      %v371 = vlaneseq
      %v372 = vshrl.u32 %v371, 7
      %v373 = vsub.s32 0, %v372
      %v374 = vrot.slane %v295, %v373
      %v375 = vlaneseq
      %v376 = vshrl.u32 %v375, 7
      %v377 = vsub.s32 0, %v376
      %v378 = vrot.slane %v297, %v377
      %v379 = vlaneseq
      %v380 = vshrl.u32 %v379, 7
      %v381 = vsub.s32 0, %v380
      %v382 = vrot.slane %v321, %v381
      %v383 = vlaneseq
      %v384 = vshrl.u32 %v383, 7
      %v385 = vsub.s32 0, %v384
      %v386 = vrot.slane %v335, %v385
      %v387 = vlaneseq
      %v388 = vshrl.u32 %v387, 7
      %v389 = vsub.s32 0, %v388
      %v390 = vrot.slane %v343, %v389
      %v391 = vlaneseq
      %v392 = vshrl.u32 %v391, 7
      %v393 = vsub.s32 0, %v392
      %v394 = vrot.slane %v345, %v393
      %v395 = vlaneseq
      %v396 = vshrl.u32 %v395, 7
      %v397 = vsub.s32 0, %v396
      %v398 = vrot.slane %v328, %v397
      %v399 = vlaneseq
      %v400 = vshrl.u32 %v399, 7
      %v401 = vsub.s32 0, %v400
      %v402 = vrot.slane %v342, %v401
      %v403 = vlaneseq
      %v404 = vshrl.u32 %v403, 7
      %v405 = vsub.s32 0, %v404
      %v406 = vrot.slane %v344, %v405
      %v407 = vlaneseq
      %v408 = vshrl.u32 %v407, 7
      %v409 = vsub.s32 0, %v408
      %v410 = vrot.slane %v346, %v409
      %v427 = vmul.f32 %v222, %v350
      %v428 = vmul.f32 %v223, %v354
      %v429 = vmul.f32 %v224, %v358
      %v430 = vmul.f32 %v225, %v362
      %v431 = vmul.f32 %v226, %v366
      %v432 = vmul.f32 %v227, %v370
      %v433 = vmul.f32 %v228, %v374
      %v434 = vmul.f32 %v229, %v378
      %v435 = vmul.f32 %v230, %v382
      %v436 = vmul.f32 %v231, %v386
      %v437 = vmul.f32 %v232, %v390
      %v438 = vmul.f32 %v233, %v394
      %v439 = vmul.f32 %v234, %v398
      %v440 = vmul.f32 %v235, %v402
      %v441 = vmul.f32 %v236, %v406
      %v442 = vmul.f32 %v237, %v410
      %v443 = vsel %vm240, %v427, 0.0
      %444 = vadd.xlane.f32.xlu0 %v443
      %v445 = vpop.xlane.xlu0 %444
      %v446 = vsel %vm240, %v428, 0.0
      %447 = vadd.xlane.f32.xlu0 %v446
      %v448 = vpop.xlane.xlu0 %447
      %v449 = vsel %vm240, %v429, 0.0
      %450 = vadd.xlane.f32.xlu0 %v449
      %v451 = vpop.xlane.xlu0 %450
      %v452 = vsel %vm240, %v430, 0.0
      %453 = vadd.xlane.f32.xlu0 %v452
      %v454 = vpop.xlane.xlu0 %453
      %v455 = vsel %vm240, %v431, 0.0
      %456 = vadd.xlane.f32.xlu0 %v455
      %v457 = vpop.xlane.xlu0 %456
      %v458 = vsel %vm240, %v432, 0.0
      %459 = vadd.xlane.f32.xlu0 %v458
      %v460 = vpop.xlane.xlu0 %459
      %v461 = vsel %vm240, %v433, 0.0
      %462 = vadd.xlane.f32.xlu0 %v461
      %v463 = vpop.xlane.xlu0 %462
      %v464 = vsel %vm240, %v434, 0.0
      %465 = vadd.xlane.f32.xlu0 %v464
      %v466 = vpop.xlane.xlu0 %465
      %v467 = vsel %vm240, %v435, 0.0
      %468 = vadd.xlane.f32.xlu0 %v467
      %v469 = vpop.xlane.xlu0 %468
      %v470 = vsel %vm240, %v436, 0.0
      %471 = vadd.xlane.f32.xlu0 %v470
      %v472 = vpop.xlane.xlu0 %471
      %v473 = vsel %vm240, %v437, 0.0
      %474 = vadd.xlane.f32.xlu0 %v473
      %v475 = vpop.xlane.xlu0 %474
      %v476 = vsel %vm240, %v438, 0.0
      %477 = vadd.xlane.f32.xlu0 %v476
      %v478 = vpop.xlane.xlu0 %477
      %v479 = vsel %vm240, %v439, 0.0
      %480 = vadd.xlane.f32.xlu0 %v479
      %v481 = vpop.xlane.xlu0 %480
      %v482 = vsel %vm240, %v440, 0.0
      %483 = vadd.xlane.f32.xlu0 %v482
      %v484 = vpop.xlane.xlu0 %483
      %v485 = vsel %vm240, %v441, 0.0
      %486 = vadd.xlane.f32.xlu0 %v485
      %v487 = vpop.xlane.xlu0 %486
      %v488 = vsel %vm240, %v442, 0.0
      %489 = vadd.xlane.f32.xlu0 %v488
      %v490 = vpop.xlane.xlu0 %489
      %v507 = vlaneseq
      %v508 = vand.u32 %v507, 127
      %v509 = vlaneseq
      %v510 = vshrl.u32 %v509, 7
      %v511 = vsub.s32 %v508, %v510
      %v512 = vrot.slane %v445, %v511
      %v513 = vlaneseq
      %v514 = vshrl.u32 %v513, 7
      %v515 = vsub.s32 %v508, %v514
      %v516 = vrot.slane %v448, %v515
      %v517 = vlaneseq
      %v518 = vshrl.u32 %v517, 7
      %v519 = vsub.s32 %v508, %v518
      %v520 = vrot.slane %v451, %v519
      %v521 = vlaneseq
      %v522 = vshrl.u32 %v521, 7
      %v523 = vsub.s32 %v508, %v522
      %v524 = vrot.slane %v454, %v523
      %v525 = vlaneseq
      %v526 = vshrl.u32 %v525, 7
      %v527 = vsub.s32 %v508, %v526
      %v528 = vrot.slane %v457, %v527
      %v529 = vlaneseq
      %v530 = vshrl.u32 %v529, 7
      %v531 = vsub.s32 %v508, %v530
      %v532 = vrot.slane %v460, %v531
      %v533 = vlaneseq
      %v534 = vshrl.u32 %v533, 7
      %v535 = vsub.s32 %v508, %v534
      %v536 = vrot.slane %v463, %v535
      %v537 = vlaneseq
      %v538 = vshrl.u32 %v537, 7
      %v539 = vsub.s32 %v508, %v538
      %v540 = vrot.slane %v466, %v539
      %v541 = vlaneseq
      %v542 = vshrl.u32 %v541, 7
      %v543 = vsub.s32 %v508, %v542
      %v544 = vrot.slane %v469, %v543
      %v545 = vlaneseq
      %v546 = vshrl.u32 %v545, 7
      %v547 = vsub.s32 %v508, %v546
      %v548 = vrot.slane %v472, %v547
      %v549 = vlaneseq
      %v550 = vshrl.u32 %v549, 7
      %v551 = vsub.s32 %v508, %v550
      %v552 = vrot.slane %v475, %v551
      %v553 = vlaneseq
      %v554 = vshrl.u32 %v553, 7
      %v555 = vsub.s32 %v508, %v554
      %v556 = vrot.slane %v478, %v555
      %v557 = vlaneseq
      %v558 = vshrl.u32 %v557, 7
      %v559 = vsub.s32 %v508, %v558
      %v560 = vrot.slane %v481, %v559
      %v561 = vlaneseq
      %v562 = vshrl.u32 %v561, 7
      %v563 = vsub.s32 %v508, %v562
      %v564 = vrot.slane %v484, %v563
      %v565 = vlaneseq
      %v566 = vshrl.u32 %v565, 7
      %v567 = vsub.s32 %v508, %v566
      %v568 = vrot.slane %v487, %v567
      %v569 = vlaneseq
      %v570 = vshrl.u32 %v569, 7
      %v571 = vsub.s32 %v508, %v570
      %v572 = vrot.slane %v490, %v571
      %vm573 = vcmask 1041409
      %v574 = vsel %vm573, %v516, %v512
      %vm575 = vcmask 1042434
      %v576 = vsel %vm575, %v520, %v574
      %vm577 = vcmask 1043459
      %v578 = vsel %vm577, %v524, %v576
      %vm579 = vcmask 1044484
      %v580 = vsel %vm579, %v528, %v578
      %vm581 = vcmask 1045509
      %v582 = vsel %vm581, %v532, %v580
      %vm583 = vcmask 1046534
      %v584 = vsel %vm583, %v536, %v582
      %vm585 = vcmask 1047559
      %v586 = vsel %vm585, %v540, %v584
      %v587 = vsel %vm573, %v548, %v544
      %v588 = vsel %vm575, %v552, %v587
      %v589 = vsel %vm577, %v556, %v588
      %v590 = vsel %vm579, %v560, %v589
      %v591 = vsel %vm581, %v564, %v590
      %v592 = vsel %vm583, %v568, %v591
      %v593 = vsel %vm585, %v572, %v592
      %v596 = vsub.f32 %v243, %v586
      %v597 = vsub.f32 %v246, %v593
      %vm598 = vcmask 64512
      %599 = vst.msk [vmem:[%s216] sm:$0xff] %vm598, %v596
      %600 = vst.msk [vmem:[%s216 + $0x8] sm:$0xff] %vm598, %v597
      %s601 = smul.u32 2, %s14
      %p602 = scmp.lt.s32.totalorder %s601, 7
      %s603 = scalar_select %p602, %s601, 7
      %s604 = smul.addr %s603, 8
      %s605 = scalar_lea.vmem %s3, %s604
      // Predicated region
      $region33: #{tpu_custom_call.1} parent=31 // pred_check
        %p606 = pneg %p110
      $region34: #{tpu_custom_call.1} parent=31 // pred_check_branch
        %608 = sbr.rel (%p606) target = $region36
      $region35: #{tpu_custom_call.1} parent=31 // pred_region
        %s609 = smul.u32 2, %s14
      $region36: #{tpu_custom_call.1} parent=31 // pred_fallthru
        _
    $region32: #{tpu_custom_call.1} parent=5 // pred_fallthru
      _
    %p610 = scmp.le.s32.totalorder 2, %s9
    // Predicated region
    $region37: #{tpu_custom_call.1} parent=5 // pred_check
      %p611 = pneg %p610
    $region38: #{tpu_custom_call.1} parent=5 // pred_check_branch
      %613 = sbr.rel (%p611) target = $region40
    $region39: #{tpu_custom_call.1} parent=5 // pred_region
      %s614 = ssub.s32 %s9, 2
      // Predicated region
      $region41: #{tpu_custom_call.1} parent=39 // pred_check
        %p615 = pneg %p116
      $region42: #{tpu_custom_call.1} parent=39 // pred_check_branch
        %617 = sbr.rel (%p615) target = $region44
      $region43: #{tpu_custom_call.1} parent=39 // pred_region
        %s618 = smul.u32 2, %s15
        %p619 = scmp.lt.s32.totalorder %s618, 7
        %s620 = scalar_select %p619, %s618, 7
        %s621 = smul.addr %s620, 8
        %s622 = scalar_lea.vmem %s3, %s621
      $region44: #{tpu_custom_call.1} parent=39 // pred_fallthru
        _
    $region40: #{tpu_custom_call.1} parent=5 // pred_fallthru
      _
  $region6: #{tpu_custom_call.1} parent=0 // loop_footer
    %s13 = sadd.s32 1, %s9
  $region7: #{tpu_custom_call.1} parent=0 // loop_footer_branch
    %8 = sbr.rel target = $region3
  $region8: #{tpu_custom_call.1} parent=0 // loop_exit
    _

</llo_original>
